<compile_context>
chip_gen: v7x
topology: tpu7x:2x2x1
jax: 0.10.0
libtpu: 0.0.40
codegen_flags: <defaults>
</compile_context>

<pallas_src>
import functools

import jax
import jax.numpy as jnp
from jax.experimental import pallas as pl
from jax.experimental.pallas import tpu as pltpu


def _rmsnorm_kernel(x_ref, w_ref, o_ref, *, eps: float, inv_dim: float):
    # x_ref: (block_rows, dim)   w_ref: (1, dim)   o_ref: (block_rows, dim)
    x = x_ref[...].astype(jnp.float32)                        # x.float()
    ss = jnp.sum(x * x, axis=-1, keepdims=True) * inv_dim     # mean(x^2, -1)
    inv = jax.lax.rsqrt(ss + eps)                             # rsqrt(. + eps)
    normed = (x * inv).astype(o_ref.dtype)                    # .type_as(x)
    o_ref[...] = normed * w_ref[...]                          # * weight (pre-cast)


def _vmem_capacity_bytes() -> int:
    """Physical VMEM per core; conservative (v7x) fallback if query fails."""
    try:
        return int(pltpu.get_tpu_info().vmem_capacity_bytes)
    except Exception:
        return 64 << 20


def _pick_block_rows(rows: int, dim: int, itemsize: int, vmem_bytes: int) -> int:
    # Sublane packing: 8 rows for 4-byte, 16 for 2-byte, 32 for 1-byte dtypes.
    sublane = max(8, 32 // max(itemsize, 1))
    # Working-set estimate per row of tile: double-buffered input + output
    # tiles plus the fp32 temporary (x upcast, reused twice).
    bytes_per_row = dim * (2 * itemsize + 2 * itemsize + 4)
    target = int(vmem_bytes * 0.4)          # leave headroom (important on v7x)
    block_rows = max(sublane, min(1024, target // max(bytes_per_row, 1)))
    block_rows = max((block_rows // sublane) * sublane, sublane)
    # Don't allocate tiles larger than the (sublane-rounded) problem itself.
    rows_rounded = ((rows + sublane - 1) // sublane) * sublane
    return min(block_rows, max(rows_rounded, sublane))


def rmsnorm(x: jax.Array, weight: jax.Array, eps: float = 1e-6,
            block_rows: int | None = None) -> jax.Array:
    """RMSNorm over the last axis of `x`, matching the PyTorch module."""
    orig_shape = x.shape
    dim = orig_shape[-1]
    assert weight.shape == (dim,)

    x2d = x.reshape(-1, dim)
    rows = x2d.shape[0]
    itemsize = x2d.dtype.itemsize

    # Weight cast hoisted to the wrapper (tiny, DMA'd once — constant index_map).
    w2d = weight.astype(x.dtype).reshape(1, dim)

    vmem_bytes = _vmem_capacity_bytes()
    if block_rows is None:
        block_rows = _pick_block_rows(rows, dim, itemsize, vmem_bytes)

    grid = (pl.cdiv(rows, block_rows),)  # ragged tail handled by Pallas masking

    # Scoped-VMEM limit: cover the double-buffered tiles + fp32 temp + margin,
    # but stay well under physical VMEM (matters on v7x's 64 MiB).
    working_set = block_rows * dim * (4 * itemsize + 4) + dim * itemsize
    vmem_limit = min(int(vmem_bytes * 0.9),
                     max(working_set + (4 << 20), 32 << 20))

    out = pl.pallas_call(
        functools.partial(_rmsnorm_kernel, eps=eps, inv_dim=1.0 / dim),
        out_shape=jax.ShapeDtypeStruct((rows, dim), x.dtype),
        grid=grid,
        in_specs=[
            pl.BlockSpec((block_rows, dim), lambda i: (i, 0)),
            pl.BlockSpec((1, dim), lambda i: (0, 0)),
        ],
        out_specs=pl.BlockSpec((block_rows, dim), lambda i: (i, 0)),
        compiler_params=pltpu.CompilerParams(
            dimension_semantics=("parallel",),   # sharded across TCs on v7x
            vmem_limit_bytes=vmem_limit),
    )(x2d, w2d)

    return out.reshape(orig_shape)


def rmsnorm_reference(x, weight, eps=1e-6):
    xf = x.astype(jnp.float32)
    inv = jax.lax.rsqrt(jnp.mean(xf * xf, axis=-1, keepdims=True) + eps)
    return (xf * inv).astype(x.dtype) * weight.astype(x.dtype)


if __name__ == "__main__":
    key = jax.random.PRNGKey(0)
    batch, seq, hidden = 2, 8, 32

    x = jax.random.normal(key, (batch, seq, hidden), dtype=jnp.float32)
    # Deterministic parameter init: module initializes weight to ones(dim).
    weight = jnp.ones((hidden,), dtype=jnp.float32)

    out = rmsnorm(x, weight, eps=1e-6)
    jax.block_until_ready(out)

    ref = rmsnorm_reference(x, weight, eps=1e-6)
    assert out.shape == x.shape and out.dtype == x.dtype
    assert jnp.allclose(out, ref, atol=1e-5, rtol=1e-5)

    print("KERNEL_OK")
</pallas_src>

<mosaic_0001>
module attributes {stable_mosaic.version = 11 : i64} {
  func.func @_rmsnorm_kernel(%arg0: i32, %arg1: memref<16x32xf32, #tpu.memory_space<vmem>>, %arg2: memref<1x32xf32, #tpu.memory_space<vmem>>, %arg3: memref<16x32xf32, #tpu.memory_space<vmem>>) attributes {dimension_semantics = [#tpu.dimension_semantics<parallel>], iteration_bounds = array<i64: 1>, scalar_prefetch = 0 : i64, scratch_operands = 0 : i64, tpu.core_type = #tpu.core_type<tc>, window_params = [{transform_indices = @transform_0, window_bounds = array<i64: 16, 32>}, {pipeline_mode = #tpu.pipeline_mode<synchronous>, transform_indices = @transform_1, window_bounds = array<i64: 1, 32>}, {transform_indices = @transform_2, window_bounds = array<i64: 16, 32>}]} {
    %c0 = arith.constant 0 : index
    %c0_0 = arith.constant 0 : index
    %0 = vector.load %arg1[%c0, %c0_0] : memref<16x32xf32, #tpu.memory_space<vmem>>, vector<16x32xf32>
    %1 = arith.mulf %0, %0 : vector<16x32xf32>
    %cst = arith.constant dense<0.000000e+00> : vector<16xf32>
    %2 = vector.multi_reduction <add>, %1, %cst [1] : vector<16x32xf32> to vector<16xf32>
    %3 = vector.shape_cast %2 : vector<16xf32> to vector<16x1xf32>
    %cst_1 = arith.constant 3.125000e-02 : f32
    %4 = vector.broadcast %cst_1 : f32 to vector<16x1xf32>
    %5 = arith.mulf %3, %4 : vector<16x1xf32>
    %cst_2 = arith.constant 9.99999997E-7 : f32
    %6 = vector.broadcast %cst_2 : f32 to vector<16x1xf32>
    %7 = arith.addf %5, %6 : vector<16x1xf32>
    %8 = math.rsqrt %7 : vector<16x1xf32>
    %9 = vector.broadcast %8 : vector<16x1xf32> to vector<16x32xf32>
    %10 = arith.mulf %0, %9 : vector<16x32xf32>
    %c0_3 = arith.constant 0 : index
    %c0_4 = arith.constant 0 : index
    %11 = vector.load %arg2[%c0_3, %c0_4] : memref<1x32xf32, #tpu.memory_space<vmem>>, vector<1x32xf32>
    %12 = vector.broadcast %11 : vector<1x32xf32> to vector<16x32xf32>
    %13 = arith.mulf %10, %12 : vector<16x32xf32>
    %c0_5 = arith.constant 0 : index
    %c0_6 = arith.constant 0 : index
    %14 = vector.load %arg3[%c0_5, %c0_6] : memref<16x32xf32, #tpu.memory_space<vmem>>, vector<16x32xf32>
    tpu.vector_store %arg3[%c0_5, %c0_6], %13 {strides = array<i32>} : memref<16x32xf32, #tpu.memory_space<vmem>>, vector<16x32xf32>,
    return
  }
  func.func @transform_0(%arg0: i32) -> (i32, i32) {
    %c0_i32 = arith.constant 0 : i32
    %c0_i32_0 = arith.constant 0 : i32
    return %arg0, %c0_i32 : i32, i32
  }
  func.func @transform_1(%arg0: i32) -> (i32, i32) {
    %c0_i32 = arith.constant 0 : i32
    %c0_i32_0 = arith.constant 0 : i32
    %c0_i32_1 = arith.constant 0 : i32
    return %c0_i32, %c0_i32_0 : i32, i32
  }
  func.func @transform_2(%arg0: i32) -> (i32, i32) {
    %c0_i32 = arith.constant 0 : i32
    %c0_i32_0 = arith.constant 0 : i32
    return %arg0, %c0_i32 : i32, i32
  }
}

</mosaic_0001>

<llo_original>
// kernel: tpu_custom_call.1
$region0: #{tpu_custom_call.1}
  #allocation0 [shape = 'u32[]', space=smem, size = 0x4, offset = 0x4, fixed_abs, tag = 'smem constant byte address 0x4 - core index']
  #allocation1 [shape = 'u32[144,128]{1,0:T(1,128)}', space=vmem, size = 0x12000, scoped, tag = 'internal scratch']
  %s0 = inlined_call_operand.hbm [shape: f32[16,32], index: 0, kind: input, shape index: {}]
  %s1 = inlined_call_operand.vmem [shape: f32[1,32], index: 1, kind: input, shape index: {}]
  %s2 = inlined_call_operand.hbm [shape: f32[16,32], index: 2, kind: output, shape index: {}]
  %s3 = sld [smem:[#allocation0]]
  $region22: #{tpu_custom_call.1} parent=0
    _
  %s5 = ssub.s32 1, %s3
  %s6 = scalar_select 0, %s5, %s3
  $region1: #{tpu_custom_call.1} parent=0
    #allocation2 [shape = 'u8[8192]{0}', space=vmem, size = 0x2000, scoped, tag = 'input window, operand 0, single buffered']
    #allocation3 [shape = 's32[1]{0}', space=sflag, size = 0x4, scoped, tag = 'scoped memory for tpu_custom_call.1']
    #allocation4 [shape = 's32[1]{0}', space=sflag, size = 0x4, scoped, tag = 'scoped memory for tpu_custom_call.1']
    #allocation5 [shape = 'u8[8192]{0}', space=vmem, size = 0x2000, scoped, tag = 'output window, operand 0, single buffered']
    %7 = vsyncpa [#allocation3], 0
    %8 = vsyncpa [#allocation4], 0
    // Predicated region
    $region2: #{tpu_custom_call.1} parent=1 // pred_check
      _
    $region3: #{tpu_custom_call.1} parent=1 // pred_check_branch
      %10 = sbr.rel (0) target = $region5
    $region4: #{tpu_custom_call.1} parent=1 // pred_region
      %s12 = ssub.s32 256, 256
      %13 = vsyncadd [#allocation3], %s12
      %s14 = sshll.u32 [#allocation2], 4
      %s15 = int_to_ptr.vmem [resolvable:$true] %s14
      %20 = dma.hbm_to_vmem [thread:$0]  %s0, 256, %s15, [#allocation3], 128, 128, 8
    $region5: #{tpu_custom_call.1} parent=1 // pred_fallthru
      _
    // Predicated region
    $region6: #{tpu_custom_call.1} parent=1 // pred_check
      _
    $region7: #{tpu_custom_call.1} parent=1 // pred_check_branch
      %22 = sbr.rel (0) target = $region9
    $region8: #{tpu_custom_call.1} parent=1 // pred_region
      _
    $region9: #{tpu_custom_call.1} parent=1 // pred_fallthru
      _
    // Predicated region
    $region10: #{tpu_custom_call.1} parent=1 // pred_check
      _
    $region11: #{tpu_custom_call.1} parent=1 // pred_check_branch
      %24 = sbr.rel (0) target = $region13
    $region12: #{tpu_custom_call.1} parent=1 // pred_region
      %25 = dma.done [#allocation3], 256
    $region13: #{tpu_custom_call.1} parent=1 // pred_fallthru
      _
    %v26 = vld [vmem:[#allocation2] sm:$0xff]
    %v27 = vld [vmem:[#allocation2 + $0x8] sm:$0xff]
    %v28 = vmul.f32 %v26, %v26
    %v29 = vmul.f32 %v27, %v27
    %vm30 = vcmask 261120
    %v31 = vsel %vm30, %v28, 0.0
    %32 = vadd.xlane.f32.xlu0 %v31
    %v33 = vpop.xlane.xlu0 %32
    %v34 = vsel %vm30, %v29, 0.0
    %35 = vadd.xlane.f32.xlu0 %v34
    %v36 = vpop.xlane.xlu0 %35
    %v37 = vmul.f32 %v33, 0.03125
    %v38 = vmul.f32 %v36, 0.03125
    %v39 = vadd.f32 %v37, 1e-06
    %v40 = vadd.f32 %v38, 1e-06
    %v41 = vrsqrt.pop %v39
    %v42 = vrsqrt.pop %v40
    %v43 = vmul.f32 %v26, %v41
    %v44 = vmul.f32 %v27, %v42
    %v45 = vld [vmem:[%s1] sm:$0x1]
    %v47 = vlaneseq
    %v48 = vshrl.u32 %v47, 7
    %v49 = vsub.s32 0, %v48
    %v50 = vrot.slane %v45, %v49
    %v52 = vmul.f32 %v43, %v50
    %v53 = vmul.f32 %v44, %v50
    %54 = vst.msk [vmem:[#allocation5] sm:$0xff] %vm30, %v52
    %55 = vst.msk [vmem:[#allocation5 + $0x8] sm:$0xff] %vm30, %v53
    // Predicated region
    $region14: #{tpu_custom_call.1} parent=1 // pred_check
      _
    $region15: #{tpu_custom_call.1} parent=1 // pred_check_branch
      %57 = sbr.rel (0) target = $region17
    $region16: #{tpu_custom_call.1} parent=1 // pred_region
      %s59 = ssub.s32 256, 256
      %60 = vsyncadd [#allocation4], %s59
      %s61 = sshll.u32 [#allocation5], 4
      %s62 = int_to_ptr.vmem [resolvable:$true] %s61
      %67 = dma.vmem_to_hbm [thread:$0]  %s62, 256, %s2, [#allocation4], 128, 128, 8
    $region17: #{tpu_custom_call.1} parent=1 // pred_fallthru
      _
    // Predicated region
    $region18: #{tpu_custom_call.1} parent=1 // pred_check
      _
    $region19: #{tpu_custom_call.1} parent=1 // pred_check_branch
      %69 = sbr.rel (0) target = $region21
    $region20: #{tpu_custom_call.1} parent=1 // pred_region
      %70 = dma.done [#allocation4], 256
    $region21: #{tpu_custom_call.1} parent=1 // pred_fallthru
      _
    %71 = vsyncpa [#allocation3], 1
    %72 = vsyncpa [#allocation4], 1

</llo_original>
